<compile_context>
chip_gen: v5e
topology: v5e:2x2
jax: 0.10.0
libtpu: 0.0.40
codegen_flags: <defaults>
</compile_context>

<pallas_src>
import jax
import jax.numpy as jnp
from jax import lax
from jax.experimental import pallas as pl
from jax.experimental.pallas import tpu as pltpu


def _make_transition_kernel(act, matmul_dtype, pool_first):
    """Folded-BN -> act -> 1x1 conv -> 2x2 avg-pool for ONE image per grid step."""

    def kernel(x_ref, scale_ref, shift_ref, w_ref, pool_ref, o_ref):
        # x_ref     : (C, HW)       channels on sublanes, pixels on lanes
        # scale/shift: (C, 1)       folded BatchNorm stats + affine (f32)
        # w_ref     : (C_out, C)    1x1 conv weight (already matmul_dtype)
        # pool_ref  : (HW, HoWo)    per-image 0.25 pooling matrix (matmul_dtype)
        # o_ref     : (C_out, HoWo)
        x = x_ref[...].astype(jnp.float32)            # no-op when x is f32
        y = x * scale_ref[...] + shift_ref[...]       # folded BatchNorm2d (f32 VPU math)

        if act == "relu":
            y = jnp.maximum(y, 0.0)
        elif act == "sigmoid":
            y = jax.nn.sigmoid(y)                     # EUP
        elif act == "hardtanh":
            y = jnp.clip(y, -1.0, 1.0)
        else:
            raise ValueError(f"unknown act {act!r}")

        y = y.astype(matmul_dtype)                    # no-op when matmul_dtype == f32

        if pool_first:
            # C <= C_out: contract through the smaller channel count first.
            yp = jnp.dot(y, pool_ref[...],
                         preferred_element_type=jnp.float32)          # (C, HoWo)
            out = jnp.dot(w_ref[...], yp.astype(matmul_dtype),
                          preferred_element_type=jnp.float32)         # (C_out, HoWo)
        else:
            # typical DenseNet transition: C_out < C, conv first.
            z = jnp.dot(w_ref[...], y,
                        preferred_element_type=jnp.float32)           # (C_out, HW)
            out = jnp.dot(z.astype(matmul_dtype), pool_ref[...],
                          preferred_element_type=jnp.float32)         # (C_out, HoWo)

        o_ref[...] = out.astype(o_ref.dtype)

    return kernel


def transition_forward(x_nchw, gamma, beta, conv_w, *, act="relu",
                       matmul_dtype=jnp.float32, x_dtype=jnp.float32):
    """Pallas implementation of Transition.forward.

    x_nchw : (N, C, H, W) float32          (PyTorch NCHW input convention)
    gamma, beta : (C,)                     BatchNorm affine params
    conv_w : (C_out, C, 1, 1)              PyTorch Conv2d weight, no bias
    returns (N, C_out, H//2, W//2) float32 (NCHW, matching PyTorch output)
    """
    N, C, H, W = x_nchw.shape
    C_out = conv_w.shape[0]
    assert H % 2 == 0 and W % 2 == 0, "avg_pool2d(2) needs even H, W"
    Ho, Wo = H // 2, W // 2
    HW, HoWo = H * W, Ho * Wo

    x_f32 = x_nchw.astype(jnp.float32)
    gamma = gamma.astype(jnp.float32)
    beta = beta.astype(jnp.float32)

    # Training-mode BatchNorm statistics in ONE pass over x (biased variance,
    # eps matches the PyTorch default), folded with the affine params into a
    # single per-channel scale/shift.
    mean = jnp.mean(x_f32, axis=(0, 2, 3))
    mean_sq = jnp.mean(x_f32 * x_f32, axis=(0, 2, 3))
    var = jnp.maximum(mean_sq - mean * mean, 0.0)
    inv_std = lax.rsqrt(var + 1e-5)
    scale = (gamma * inv_std).reshape(C, 1)
    shift = (beta - mean * gamma * inv_std).reshape(C, 1)

    # Reshape-only layout plumbing (contiguous, free): (N, C, HW).
    x_in = x_f32.reshape(N, C, HW).astype(x_dtype)

    # 1x1 conv weight, cast once here (not per grid step in the kernel).
    w_t = conv_w.reshape(C_out, C).astype(matmul_dtype)

    # Per-image 2x2 average-pooling matrix, built once and VMEM-resident via a
    # constant index_map.  Size (HW, HoWo), independent of the batch.
    pix = jnp.arange(HW)
    out_idx = (pix // (2 * W)) * Wo + (pix % W) // 2        # pixel -> pooled pixel
    pool = 0.25 * (out_idx[:, None] == jnp.arange(HoWo)[None, :]).astype(jnp.float32)
    pool = pool.astype(matmul_dtype)

    pool_first = C <= C_out
    kernel = _make_transition_kernel(act, matmul_dtype, pool_first)

    # VMEM budget: double-buffered x / out blocks + the (small) constants.
    mm_isz = jnp.dtype(matmul_dtype).itemsize
    x_isz = jnp.dtype(x_dtype).itemsize
    vmem_need = (2 * C * HW * x_isz            # x block (double-buffered)
                 + 2 * C_out * HoWo * 4        # out block (double-buffered)
                 + 2 * 2 * C * 4               # scale + shift
                 + 2 * C_out * C * mm_isz      # conv weight
                 + 2 * HW * HoWo * mm_isz)     # pool matrix
    vmem_limit = int(min(48 * 1024 * 1024, max(2 * vmem_need, 4 * 1024 * 1024)))

    out = pl.pallas_call(
        kernel,
        out_shape=jax.ShapeDtypeStruct((N, C_out, HoWo), jnp.float32),
        grid_spec=pltpu.PrefetchScalarGridSpec(
            num_scalar_prefetch=0,
            grid=(N,),                                             # one image / step
            in_specs=[
                pl.BlockSpec((None, C, HW), lambda n: (n, 0, 0)),  # x (squeezed batch)
                pl.BlockSpec((C, 1), lambda n: (0, 0)),            # scale (resident)
                pl.BlockSpec((C, 1), lambda n: (0, 0)),            # shift (resident)
                pl.BlockSpec((C_out, C), lambda n: (0, 0)),        # conv weight
                pl.BlockSpec((HW, HoWo), lambda n: (0, 0)),        # per-image pool
            ],
            out_specs=pl.BlockSpec((None, C_out, HoWo), lambda n: (n, 0, 0)),
        ),
        compiler_params=pltpu.CompilerParams(
            dimension_semantics=("parallel",),
            vmem_limit_bytes=vmem_limit,
        ),
    )(x_in, scale, shift, w_t, pool)

    # (N, C_out, Ho*Wo) -> NCHW (contiguous reshape, free).
    return out.reshape(N, C_out, Ho, Wo)


def _reference_forward(x_nchw, gamma, beta, conv_w, act="relu"):
    """Pure-JAX reference mirroring the PyTorch module (training-mode BN)."""
    mean = jnp.mean(x_nchw, axis=(0, 2, 3), keepdims=True)
    var = jnp.mean((x_nchw - mean) ** 2, axis=(0, 2, 3), keepdims=True)
    y = (x_nchw - mean) / jnp.sqrt(var + 1e-5)
    y = y * gamma[None, :, None, None] + beta[None, :, None, None]
    if act == "relu":
        y = jnp.maximum(y, 0.0)
    elif act == "sigmoid":
        y = jax.nn.sigmoid(y)
    elif act == "hardtanh":
        y = jnp.clip(y, -1.0, 1.0)
    z = jnp.einsum("nchw,oc->nohw", y, conv_w.reshape(conv_w.shape[0], -1))
    N, Co, H, W = z.shape
    z = z.reshape(N, Co, H // 2, 2, W // 2, 2).mean(axis=(3, 5))
    return z


if __name__ == "__main__":
    # Small shapes consistent with the module: N=2, C=4, H=W=16, C_out=8.
    N, C, H, W, C_out = 2, 4, 16, 16, 8

    key = jax.random.PRNGKey(0)
    kx, kg, kb, kw = jax.random.split(key, 4)
    x = jax.random.normal(kx, (N, C, H, W), dtype=jnp.float32)
    gamma = 1.0 + 0.1 * jax.random.normal(kg, (C,), dtype=jnp.float32)
    beta = 0.1 * jax.random.normal(kb, (C,), dtype=jnp.float32)
    conv_w = 0.1 * jax.random.normal(kw, (C_out, C, 1, 1), dtype=jnp.float32)

    out = transition_forward(x, gamma, beta, conv_w, act="relu")
    out = jax.block_until_ready(out)
    assert out.shape == (N, C_out, H // 2, W // 2), out.shape

    ref = _reference_forward(x, gamma, beta, conv_w, act="relu")
    assert jnp.allclose(out, ref, rtol=1e-4, atol=1e-4), float(jnp.abs(out - ref).max())

    print("KERNEL_OK")
</pallas_src>

<mosaic_0001>
module attributes {stable_mosaic.version = 11 : i64} {
  func.func @kernel(%arg0: i32, %arg1: memref<1x4x256xf32, #tpu.memory_space<vmem>>, %arg2: memref<4x1xf32, #tpu.memory_space<vmem>>, %arg3: memref<4x1xf32, #tpu.memory_space<vmem>>, %arg4: memref<8x4xf32, #tpu.memory_space<vmem>>, %arg5: memref<256x64xf32, #tpu.memory_space<vmem>>, %arg6: memref<1x8x64xf32, #tpu.memory_space<vmem>>) attributes {dimension_semantics = [#tpu.dimension_semantics<parallel>], iteration_bounds = array<i64: 2>, scalar_prefetch = 0 : i64, scratch_operands = 0 : i64, tpu.core_type = #tpu.core_type<tc>, window_params = [{transform_indices = @transform_0, window_bounds = array<i64: 1, 4, 256>}, {pipeline_mode = #tpu.pipeline_mode<synchronous>, transform_indices = @transform_1, window_bounds = array<i64: 4, 1>}, {pipeline_mode = #tpu.pipeline_mode<synchronous>, transform_indices = @transform_2, window_bounds = array<i64: 4, 1>}, {pipeline_mode = #tpu.pipeline_mode<synchronous>, transform_indices = @transform_3, window_bounds = array<i64: 8, 4>}, {pipeline_mode = #tpu.pipeline_mode<synchronous>, transform_indices = @transform_4, window_bounds = array<i64: 256, 64>}, {transform_indices = @transform_5, window_bounds = array<i64: 1, 8, 64>}]} {
    %c0 = arith.constant 0 : index
    %c0_0 = arith.constant 0 : index
    %c0_1 = arith.constant 0 : index
    %0 = vector.load %arg1[%c0, %c0_0, %c0_1] : memref<1x4x256xf32, #tpu.memory_space<vmem>>, vector<1x4x256xf32>
    %1 = vector.shape_cast %0 : vector<1x4x256xf32> to vector<4x256xf32>
    %c0_2 = arith.constant 0 : index
    %c0_3 = arith.constant 0 : index
    %2 = vector.load %arg2[%c0_2, %c0_3] : memref<4x1xf32, #tpu.memory_space<vmem>>, vector<4x1xf32>
    %3 = vector.broadcast %2 : vector<4x1xf32> to vector<4x256xf32>
    %4 = arith.mulf %1, %3 : vector<4x256xf32>
    %c0_4 = arith.constant 0 : index
    %c0_5 = arith.constant 0 : index
    %5 = vector.load %arg3[%c0_4, %c0_5] : memref<4x1xf32, #tpu.memory_space<vmem>>, vector<4x1xf32>
    %6 = vector.broadcast %5 : vector<4x1xf32> to vector<4x256xf32>
    %7 = arith.addf %4, %6 : vector<4x256xf32>
    %cst = arith.constant 0.000000e+00 : f32
    %8 = vector.broadcast %cst : f32 to vector<4x256xf32>
    %9 = arith.maximumf %7, %8 : vector<4x256xf32>
    %c0_6 = arith.constant 0 : index
    %c0_7 = arith.constant 0 : index
    %10 = vector.load %arg5[%c0_6, %c0_7] : memref<256x64xf32, #tpu.memory_space<vmem>>, vector<256x64xf32>
    %cst_8 = arith.constant dense<0.000000e+00> : vector<4x64xf32>
    %11 = tpu.matmul %9, %10, %cst_8 {dimension_numbers = #tpu.dot_dimension_numbers<[1], [0], [0], [1], [0, 0, 1, 1], [], []>} : vector<4x256xf32>, vector<256x64xf32>, vector<4x64xf32> -> vector<4x64xf32>
    %c0_9 = arith.constant 0 : index
    %c0_10 = arith.constant 0 : index
    %12 = vector.load %arg4[%c0_9, %c0_10] : memref<8x4xf32, #tpu.memory_space<vmem>>, vector<8x4xf32>
    %cst_11 = arith.constant dense<0.000000e+00> : vector<8x64xf32>
    %13 = tpu.matmul %12, %11, %cst_11 {dimension_numbers = #tpu.dot_dimension_numbers<[1], [0], [0], [1], [0, 0, 1, 1], [], []>} : vector<8x4xf32>, vector<4x64xf32>, vector<8x64xf32> -> vector<8x64xf32>
    %c0_12 = arith.constant 0 : index
    %c0_13 = arith.constant 0 : index
    %c0_14 = arith.constant 0 : index
    %14 = vector.load %arg6[%c0_12, %c0_13, %c0_14] : memref<1x8x64xf32, #tpu.memory_space<vmem>>, vector<1x8x64xf32>
    %15 = vector.shape_cast %14 : vector<1x8x64xf32> to vector<8x64xf32>
    %16 = vector.shape_cast %13 : vector<8x64xf32> to vector<1x8x64xf32>
    tpu.vector_store %arg6[%c0_12, %c0_13, %c0_14], %16 {strides = array<i32>} : memref<1x8x64xf32, #tpu.memory_space<vmem>>, vector<1x8x64xf32>,
    return
  }
  func.func @transform_0(%arg0: i32) -> (i32, i32, i32) {
    %c0_i32 = arith.constant 0 : i32
    %c0_i32_0 = arith.constant 0 : i32
    %c0_i32_1 = arith.constant 0 : i32
    return %arg0, %c0_i32, %c0_i32_0 : i32, i32, i32
  }
  func.func @transform_1(%arg0: i32) -> (i32, i32) {
    %c0_i32 = arith.constant 0 : i32
    %c0_i32_0 = arith.constant 0 : i32
    %c0_i32_1 = arith.constant 0 : i32
    return %c0_i32, %c0_i32_0 : i32, i32
  }
  func.func @transform_2(%arg0: i32) -> (i32, i32) {
    %c0_i32 = arith.constant 0 : i32
    %c0_i32_0 = arith.constant 0 : i32
    %c0_i32_1 = arith.constant 0 : i32
    return %c0_i32, %c0_i32_0 : i32, i32
  }
  func.func @transform_3(%arg0: i32) -> (i32, i32) {
    %c0_i32 = arith.constant 0 : i32
    %c0_i32_0 = arith.constant 0 : i32
    %c0_i32_1 = arith.constant 0 : i32
    return %c0_i32, %c0_i32_0 : i32, i32
  }
  func.func @transform_4(%arg0: i32) -> (i32, i32) {
    %c0_i32 = arith.constant 0 : i32
    %c0_i32_0 = arith.constant 0 : i32
    %c0_i32_1 = arith.constant 0 : i32
    return %c0_i32, %c0_i32_0 : i32, i32
  }
  func.func @transform_5(%arg0: i32) -> (i32, i32, i32) {
    %c0_i32 = arith.constant 0 : i32
    %c0_i32_0 = arith.constant 0 : i32
    %c0_i32_1 = arith.constant 0 : i32
    return %arg0, %c0_i32, %c0_i32_0 : i32, i32, i32
  }
}

</mosaic_0001>

<llo_original>
// kernel: tpu_custom_call.1
$region0: #{tpu_custom_call.1}
  #allocation0 [shape = 'u32[]', space=smem, size = 0x4, offset = 0x4, fixed_abs, tag = 'smem constant byte address 0x4 - core index']
  #allocation1 [shape = 'u32[72,128]{1,0:T(1,128)}', space=vmem, size = 0x9000, scoped, tag = 'internal scratch']
  %s0 = inlined_call_operand.vmem [shape: f32[2,4,256], index: 0, kind: input, shape index: {}]
  %s1 = inlined_call_operand.vmem [shape: f32[4,1], index: 1, kind: input, shape index: {}]
  %s2 = inlined_call_operand.vmem [shape: f32[4,1], index: 2, kind: input, shape index: {}]
  %s3 = inlined_call_operand.vmem [shape: f32[8,4], index: 3, kind: input, shape index: {}]
  %s4 = inlined_call_operand.vmem [shape: f32[256,64], index: 4, kind: input, shape index: {}]
  %s5 = inlined_call_operand.hbm [shape: f32[2,8,64], index: 5, kind: output, shape index: {}]
  %s6 = sld [smem:[#allocation0]]
  $region53: #{tpu_custom_call.1} parent=0
    _
  %s8 = ssub.s32 1, %s6
  %s9 = scalar_select 0, %s8, %s6
  $region1: #{tpu_custom_call.1} parent=0
    #allocation2 [shape = 'u8[8192]{0}', space=vmem, size = 0x2000, scoped, tag = 'output window, operand 0']
    #allocation3 [shape = 's32[2]{0}', space=sflag, size = 0x8, scoped, tag = 'scoped memory for tpu_custom_call.1']
    %10 = vsyncpa [#allocation3], 0
    %s11 = scalar_lea.sflag [#allocation3], 1
    %12 = vsyncpa %s11, 0
    loop: start=0, step=1, limit=4
    $region2: #{tpu_custom_call.1} parent=1 // loop_pre_header
      _
    $region3: #{tpu_custom_call.1} parent=1 // loop_header
      %s14 = sphi 0, %s18
      %p15 = scmp.ge.s32.totalorder %s14, 4
      %s24 = sphi 0, %s26
      %s27 = sphi 0, %s24
      %s28 = sphi 0, %s27
      %s44 = sphi 0, %s28
      %s48 = sphi 0, %s48
      %s50 = sphi 0, %s48
      %s51 = sphi 0, %s50
      %s65 = sphi 0, %s51
      %s69 = sphi 0, %s69
      %s71 = sphi 0, %s69
      %s72 = sphi 0, %s71
      %s86 = sphi 0, %s72
      %s90 = sphi 0, %s90
      %s92 = sphi 0, %s90
      %s93 = sphi 0, %s92
      %s107 = sphi 0, %s93
      %s111 = sphi 0, %s111
      %s113 = sphi 0, %s111
      %s114 = sphi 0, %s113
      %s128 = sphi 0, %s114
      %s134 = sphi 0, %s136
      %s137 = sphi 0, %s134
      %s138 = sphi 0, %s137
      %s154 = sphi 0, %s138
    $region4: #{tpu_custom_call.1} parent=1 // loop_header_branch
      %17 = sbr.rel (%p15) target = $region8
    $region5: #{tpu_custom_call.1} parent=1 // loop_body
      %s19 = ssub.s32 %s14, 1
      %s20 = ssub.s32 %s14, 2
      %s21 = sadd.s32 %s14, 1
      %s22 = ssub.s32 %s14, %s21
      %p23 = scmp.eq.s32.totalorder %s22, 0
      %s25 = sadd.s32 %s24, 1
      %s26 = scalar_select %p23, %s24, %s25
      %p29 = pneg %p23
      %p30 = scmp.eq.s32.totalorder %s14, 1
      %p31 = por %p29, %p30
      %p32 = scmp.ne.s32.totalorder %s24, %s27
      %p33 = scmp.eq.s32.totalorder %s14, 0
      %p34 = por %p32, %p33
      %p35 = scmp.ne.s32.totalorder %s24, %s27
      %p36 = scmp.eq.s32.totalorder %s19, 1
      %p37 = por %p35, %p36
      %p38 = scmp.ne.s32.totalorder %s27, %s28
      %p39 = scmp.eq.s32.totalorder %s19, 0
      %p40 = por %p38, %p39
      %p41 = scmp.ne.s32.totalorder %s27, %s28
      %p42 = scmp.eq.s32.totalorder %s20, 1
      %p43 = por %p41, %p42
      %p45 = scmp.ne.s32.totalorder %s28, %s44
      %p46 = scmp.eq.s32.totalorder %s20, 0
      %p47 = por %p45, %p46
      %s49 = sadd.s32 %s48, 1
      %p52 = scmp.eq.s32.totalorder %s14, 1
      %p53 = scmp.ne.s32.totalorder %s48, %s50
      %p54 = scmp.eq.s32.totalorder %s14, 0
      %p55 = por %p53, %p54
      %p56 = scmp.ne.s32.totalorder %s48, %s50
      %p57 = scmp.eq.s32.totalorder %s19, 1
      %p58 = por %p56, %p57
      %p59 = scmp.ne.s32.totalorder %s50, %s51
      %p60 = scmp.eq.s32.totalorder %s19, 0
      %p61 = por %p59, %p60
      %p62 = scmp.ne.s32.totalorder %s50, %s51
      %p63 = scmp.eq.s32.totalorder %s20, 1
      %p64 = por %p62, %p63
      %p66 = scmp.ne.s32.totalorder %s51, %s65
      %p67 = scmp.eq.s32.totalorder %s20, 0
      %p68 = por %p66, %p67
      %s70 = sadd.s32 %s69, 1
      %p73 = scmp.eq.s32.totalorder %s14, 1
      %p74 = scmp.ne.s32.totalorder %s69, %s71
      %p75 = scmp.eq.s32.totalorder %s14, 0
      %p76 = por %p74, %p75
      %p77 = scmp.ne.s32.totalorder %s69, %s71
      %p78 = scmp.eq.s32.totalorder %s19, 1
      %p79 = por %p77, %p78
      %p80 = scmp.ne.s32.totalorder %s71, %s72
      %p81 = scmp.eq.s32.totalorder %s19, 0
      %p82 = por %p80, %p81
      %p83 = scmp.ne.s32.totalorder %s71, %s72
      %p84 = scmp.eq.s32.totalorder %s20, 1
      %p85 = por %p83, %p84
      %p87 = scmp.ne.s32.totalorder %s72, %s86
      %p88 = scmp.eq.s32.totalorder %s20, 0
      %p89 = por %p87, %p88
      %s91 = sadd.s32 %s90, 1
      %p94 = scmp.eq.s32.totalorder %s14, 1
      %p95 = scmp.ne.s32.totalorder %s90, %s92
      %p96 = scmp.eq.s32.totalorder %s14, 0
      %p97 = por %p95, %p96
      %p98 = scmp.ne.s32.totalorder %s90, %s92
      %p99 = scmp.eq.s32.totalorder %s19, 1
      %p100 = por %p98, %p99
      %p101 = scmp.ne.s32.totalorder %s92, %s93
      %p102 = scmp.eq.s32.totalorder %s19, 0
      %p103 = por %p101, %p102
      %p104 = scmp.ne.s32.totalorder %s92, %s93
      %p105 = scmp.eq.s32.totalorder %s20, 1
      %p106 = por %p104, %p105
      %p108 = scmp.ne.s32.totalorder %s93, %s107
      %p109 = scmp.eq.s32.totalorder %s20, 0
      %p110 = por %p108, %p109
      %s112 = sadd.s32 %s111, 1
      %p115 = scmp.eq.s32.totalorder %s14, 1
      %p116 = scmp.ne.s32.totalorder %s111, %s113
      %p117 = scmp.eq.s32.totalorder %s14, 0
      %p118 = por %p116, %p117
      %p119 = scmp.ne.s32.totalorder %s111, %s113
      %p120 = scmp.eq.s32.totalorder %s19, 1
      %p121 = por %p119, %p120
      %p122 = scmp.ne.s32.totalorder %s113, %s114
      %p123 = scmp.eq.s32.totalorder %s19, 0
      %p124 = por %p122, %p123
      %p125 = scmp.ne.s32.totalorder %s113, %s114
      %p126 = scmp.eq.s32.totalorder %s20, 1
      %p127 = por %p125, %p126
      %p129 = scmp.ne.s32.totalorder %s114, %s128
      %p130 = scmp.eq.s32.totalorder %s20, 0
      %p131 = por %p129, %p130
      %s132 = ssub.s32 %s14, %s21
      %p133 = scmp.eq.s32.totalorder %s132, 0
      %s135 = sadd.s32 %s134, 1
      %s136 = scalar_select %p133, %s134, %s135
      %p139 = pneg %p133
      %p140 = scmp.eq.s32.totalorder %s14, 1
      %p141 = por %p139, %p140
      %p142 = scmp.ne.s32.totalorder %s134, %s137
      %p143 = scmp.eq.s32.totalorder %s14, 0
      %p144 = por %p142, %p143
      %p145 = scmp.ne.s32.totalorder %s134, %s137
      %p146 = scmp.eq.s32.totalorder %s19, 1
      %p147 = por %p145, %p146
      %p148 = scmp.ne.s32.totalorder %s137, %s138
      %p149 = scmp.eq.s32.totalorder %s19, 0
      %p150 = por %p148, %p149
      %p151 = scmp.ne.s32.totalorder %s137, %s138
      %p152 = scmp.eq.s32.totalorder %s20, 1
      %p153 = por %p151, %p152
      %p155 = scmp.ne.s32.totalorder %s138, %s154
      %p156 = scmp.eq.s32.totalorder %s20, 0
      %p157 = por %p155, %p156
      %p158 = scmp.le.s32.totalorder 1, %s14
      %p159 = scmp.lt.s32.totalorder %s14, 3
      %p160 = pnand %p158, %p159
      %p161 = pneg %p160
      // Predicated region
      $region9: #{tpu_custom_call.1} parent=5 // pred_check
        _
      $region10: #{tpu_custom_call.1} parent=5 // pred_check_branch
        %163 = sbr.rel (%p160) target = $region12
      $region11: #{tpu_custom_call.1} parent=5 // pred_region
        %s164 = ssub.s32 %s14, 1
        // Predicated region
        $region13: #{tpu_custom_call.1} parent=11 // pred_check
          %p165 = pneg %p61
        $region14: #{tpu_custom_call.1} parent=11 // pred_check_branch
          %167 = sbr.rel (%p165) target = $region16
        $region15: #{tpu_custom_call.1} parent=11 // pred_region
          _
        $region16: #{tpu_custom_call.1} parent=11 // pred_fallthru
          _
        // Predicated region
        $region17: #{tpu_custom_call.1} parent=11 // pred_check
          %p168 = pneg %p82
        $region18: #{tpu_custom_call.1} parent=11 // pred_check_branch
          %170 = sbr.rel (%p168) target = $region20
        $region19: #{tpu_custom_call.1} parent=11 // pred_region
          _
        $region20: #{tpu_custom_call.1} parent=11 // pred_fallthru
          _
        // Predicated region
        $region21: #{tpu_custom_call.1} parent=11 // pred_check
          %p171 = pneg %p103
        $region22: #{tpu_custom_call.1} parent=11 // pred_check_branch
          %173 = sbr.rel (%p171) target = $region24
        $region23: #{tpu_custom_call.1} parent=11 // pred_region
          _
        $region24: #{tpu_custom_call.1} parent=11 // pred_fallthru
          _
        // Predicated region
        $region25: #{tpu_custom_call.1} parent=11 // pred_check
          %p174 = pneg %p124
        $region26: #{tpu_custom_call.1} parent=11 // pred_check_branch
          %176 = sbr.rel (%p174) target = $region28
        $region27: #{tpu_custom_call.1} parent=11 // pred_region
          _
        $region28: #{tpu_custom_call.1} parent=11 // pred_fallthru
          _
      $region12: #{tpu_custom_call.1} parent=5 // pred_fallthru
        _
      %p177 = scmp.lt.s32.totalorder %s14, 2
      // Predicated region
      $region29: #{tpu_custom_call.1} parent=5 // pred_check
        %p178 = pneg %p177
      $region30: #{tpu_custom_call.1} parent=5 // pred_check_branch
        %180 = sbr.rel (%p178) target = $region32
      $region31: #{tpu_custom_call.1} parent=5 // pred_region
        // Predicated region
        $region33: #{tpu_custom_call.1} parent=31 // pred_check
          %p181 = pneg %p34
        $region34: #{tpu_custom_call.1} parent=31 // pred_check_branch
          %183 = sbr.rel (%p181) target = $region36
        $region35: #{tpu_custom_call.1} parent=31 // pred_region
          %p184 = scmp.lt.s32.totalorder %s14, 1
          %s185 = scalar_select %p184, %s14, 1
          %s186 = smul.addr %s185, 2
          %s187 = smul.addr %s186, 4
          %s188 = scalar_lea.vmem %s0, %s187
        $region36: #{tpu_custom_call.1} parent=31 // pred_fallthru
          _
      $region32: #{tpu_custom_call.1} parent=5 // pred_fallthru
        _
      %p189 = scmp.le.s32.totalorder 1, %s14
      %p190 = scmp.lt.s32.totalorder %s14, 3
      %p191 = pnand %p189, %p190
      %p192 = pneg %p191
      // Predicated region
      $region37: #{tpu_custom_call.1} parent=5 // pred_check
        _
      $region38: #{tpu_custom_call.1} parent=5 // pred_check_branch
        %194 = sbr.rel (%p191) target = $region40
      $region39: #{tpu_custom_call.1} parent=5 // pred_region
        %s195 = ssub.s32 %s14, 1
        %p196 = scmp.lt.s32.totalorder %s19, 1
        %s197 = scalar_select %p196, %s19, 1
        %s198 = smul.addr %s197, 2
        %s199 = smul.addr %s198, 4
        %s200 = scalar_lea.vmem %s0, %s199
        %p201 = pneg %p40
        %p202 = pneg %p37
        %p203 = pneg %p61
        %p204 = pneg %p58
        %p205 = pneg %p82
        %p206 = pneg %p79
        %p207 = pneg %p103
        %p208 = pneg %p100
        %p209 = pneg %p124
        %p210 = pneg %p121
        %p211 = pneg %p150
        %p212 = pneg %p147
        %s213 = sand.u32 %s137, 1
        %s214 = scalar_lea.sflag [#allocation3], %s213
        %s215 = sand.u32 %s137, 1
        %s216 = smul.addr %s215, 8
        %s217 = scalar_lea.vmem [#allocation2], %s216
        %p218 = scmp.lt.s32.totalorder %s19, 1
        %s219 = scalar_select %p218, %s19, 1
        %s220 = smul.addr %s219, 2
        %s221 = smul.addr %s220, 4
        %s222 = scalar_lea.vmem %s0, %s221
        %v223 = vld [vmem:[%s222] sm:$0xff]
        %v224 = vld [vmem:[%s1] sm:$0xf]
        %226 = vset.pattern.permute.xlu0 0
        %227 = vperm.xlu0 %226, %v224
        %v228 = vpop.permute.xlu0 %227
        %v230 = vunpack.c.l.s4 839922192
        %v231 = vunpack.c.0.s8 %v230
        %v232 = vperm.slane %v228, %v231
        %v234 = vmul.f32 %v223, %v232
        %v235 = vld [vmem:[%s2] sm:$0xf]
        %237 = vset.pattern.permute.xlu0 0
        %238 = vperm.xlu0 %237, %v235
        %v239 = vpop.permute.xlu0 %238
        %v241 = vunpack.c.l.s4 839922192
        %v242 = vunpack.c.0.s8 %v241
        %v243 = vperm.slane %v239, %v242
        %v245 = vadd.f32 %v234, %v243
        %v246 = vmax.f32 %v245, 0.0
        %v247 = vld [vmem:[%s4] sm:$0xff]
        %v248 = vld [vmem:[%s4 + $0x8] sm:$0xff]
        %v249 = vld [vmem:[%s4 + $0x10] sm:$0xff]
        %v250 = vld [vmem:[%s4 + $0x18] sm:$0xff]
        %v251 = vld [vmem:[%s4 + $0x20] sm:$0xff]
        %v252 = vld [vmem:[%s4 + $0x28] sm:$0xff]
        %v253 = vld [vmem:[%s4 + $0x30] sm:$0xff]
        %v254 = vld [vmem:[%s4 + $0x38] sm:$0xff]
        %v255 = vld [vmem:[%s4 + $0x40] sm:$0xff]
        %v256 = vld [vmem:[%s4 + $0x48] sm:$0xff]
        %v257 = vld [vmem:[%s4 + $0x50] sm:$0xff]
        %v258 = vld [vmem:[%s4 + $0x58] sm:$0xff]
        %v259 = vld [vmem:[%s4 + $0x60] sm:$0xff]
        %v260 = vld [vmem:[%s4 + $0x68] sm:$0xff]
        %v261 = vld [vmem:[%s4 + $0x70] sm:$0xff]
        %v262 = vld [vmem:[%s4 + $0x78] sm:$0xff]
        %v263 = vld [vmem:[%s4 + $0x80] sm:$0xff]
        %v264 = vld [vmem:[%s4 + $0x88] sm:$0xff]
        %v265 = vld [vmem:[%s4 + $0x90] sm:$0xff]
        %v266 = vld [vmem:[%s4 + $0x98] sm:$0xff]
        %v267 = vld [vmem:[%s4 + $0xa0] sm:$0xff]
        %v268 = vld [vmem:[%s4 + $0xa8] sm:$0xff]
        %v269 = vld [vmem:[%s4 + $0xb0] sm:$0xff]
        %v270 = vld [vmem:[%s4 + $0xb8] sm:$0xff]
        %v271 = vld [vmem:[%s4 + $0xc0] sm:$0xff]
        %v272 = vld [vmem:[%s4 + $0xc8] sm:$0xff]
        %v273 = vld [vmem:[%s4 + $0xd0] sm:$0xff]
        %v274 = vld [vmem:[%s4 + $0xd8] sm:$0xff]
        %v275 = vld [vmem:[%s4 + $0xe0] sm:$0xff]
        %v276 = vld [vmem:[%s4 + $0xe8] sm:$0xff]
        %v277 = vld [vmem:[%s4 + $0xf0] sm:$0xff]
        %v278 = vld [vmem:[%s4 + $0xf8] sm:$0xff]
        %280 = vst [vmem:[#allocation1] ss:$2 sm:$0xff] %v246
        %v281 = vld.sshfl [vmem:[#allocation1] sm:$0xff pattern:$0x75316420]
        %v282 = vld.sshfl [vmem:[#allocation1 + $0x8] sm:$0xff pattern:$0x75316420]
        %285 = vmatpush.msra.mxu0 %v262
        %286 = vmatpush.msra.mxu0 %v261
        %287 = vmatpush.msra.mxu0 %v260
        %288 = vmatpush.msra.mxu0 %v259
        %289 = vmatpush.msra.mxu0 %v258
        %290 = vmatpush.msra.mxu0 %v257
        %291 = vmatpush.msra.mxu0 %v256
        %292 = vmatpush.msra.mxu0 %v255
        %293 = vmatpush.msra.mxu0 %v254
        %294 = vmatpush.msra.mxu0 %v253
        %295 = vmatpush.msra.mxu0 %v252
        %296 = vmatpush.msra.mxu0 %v251
        %297 = vmatpush.msra.mxu0 %v250
        %298 = vmatpush.msra.mxu0 %v249
        %299 = vmatpush.msra.mxu0 %v248
        %300 = vmatpush.msra.mxu0 %v247
        %301 = vmatmul.f32.gmra.mxu0 %v281
        %v302 = vpop.f32.mrf.mxu0
        %v303 = vadd.f32 0.0, %v302
        %304 = vdwg.mxu0
        %305 = vmatpush.msra.mxu0 %v278
        %306 = vmatpush.msra.mxu0 %v277
        %307 = vmatpush.msra.mxu0 %v276
        %308 = vmatpush.msra.mxu0 %v275
        %309 = vmatpush.msra.mxu0 %v274
        %310 = vmatpush.msra.mxu0 %v273
        %311 = vmatpush.msra.mxu0 %v272
        %312 = vmatpush.msra.mxu0 %v271
        %313 = vmatpush.msra.mxu0 %v270
        %314 = vmatpush.msra.mxu0 %v269
        %315 = vmatpush.msra.mxu0 %v268
        %316 = vmatpush.msra.mxu0 %v267
        %317 = vmatpush.msra.mxu0 %v266
        %318 = vmatpush.msra.mxu0 %v265
        %319 = vmatpush.msra.mxu0 %v264
        %320 = vmatpush.msra.mxu0 %v263
        %321 = vmatmul.f32.gmra.mxu0 %v282
        %v322 = vpop.f32.mrf.mxu0
        %v323 = vadd.f32 %v303, %v322
        %324 = vdwg.mxu0
        %v325 = vld [vmem:[%s3] sm:$0xff]
        %vm326 = vcmask 31744
        %v328 = vsel %vm326, %v325, 0
        %vm330 = vcmask 1043456
        %v332 = vsel %vm330, %v323, 0
        %334 = vmatpush.msra.mxu0 0.0
        %335 = vmatpush.msra.mxu0 0.0
        %336 = vmatpush.msra.mxu0 0.0
        %337 = vmatpush.msra.mxu0 0.0
        %338 = vmatpush.msra.mxu0 0.0
        %339 = vmatpush.msra.mxu0 0.0
        %340 = vmatpush.msra.mxu0 0.0
        %341 = vmatpush.msra.mxu0 0.0
        %342 = vmatpush.msra.mxu0 0.0
        %343 = vmatpush.msra.mxu0 0.0
        %344 = vmatpush.msra.mxu0 0.0
        %345 = vmatpush.msra.mxu0 0.0
        %346 = vmatpush.msra.mxu0 0.0
        %347 = vmatpush.msra.mxu0 0.0
        %348 = vmatpush.msra.mxu0 0.0
        %349 = vmatpush.msra.mxu0 %v332
        %350 = vmatmul.f32.gmra.mxu0 %v328
        %v351 = vpop.f32.mrf.mxu0
        %v352 = vadd.f32 0.0, %v351
        %353 = vdwg.mxu0
        %vm354 = vcmask 523264
        %355 = vst.msk [vmem:[%s217] sm:$0xff] %vm354, %v352
        %s356 = sand.u32 %s137, 1
        %s357 = scalar_lea.sflag [#allocation3], %s356
        %s358 = sand.u32 %s137, 1
        %s359 = smul.addr %s358, 8
        %s360 = scalar_lea.vmem [#allocation2], %s359
        // Predicated region
        $region41: #{tpu_custom_call.1} parent=39 // pred_check
          %p361 = pneg %p147
        $region42: #{tpu_custom_call.1} parent=39 // pred_check_branch
          %363 = sbr.rel (%p361) target = $region44
        $region43: #{tpu_custom_call.1} parent=39 // pred_region
          %365 = vsyncadd %s357, 0
          %s366 = smul.addr %s19, 8
          %s367 = scalar_lea.hbm %s5, %s366
          %s369 = sshll.u32 %s360, 4
          %s370 = int_to_ptr.vmem [resolvable:$true] %s369
          %s371 = sshll.u32 %s367, 4
          %s372 = int_to_ptr.hbm [resolvable:$true] %s371
          %374 = dma.vmem_to_hbm [thread:$0]  %s370, 128, %s372, %s357
        $region44: #{tpu_custom_call.1} parent=39 // pred_fallthru
          _
      $region40: #{tpu_custom_call.1} parent=5 // pred_fallthru
        _
      %p375 = scmp.le.s32.totalorder 2, %s14
      // Predicated region
      $region45: #{tpu_custom_call.1} parent=5 // pred_check
        %p376 = pneg %p375
      $region46: #{tpu_custom_call.1} parent=5 // pred_check_branch
        %378 = sbr.rel (%p376) target = $region48
      $region47: #{tpu_custom_call.1} parent=5 // pred_region
        %s379 = ssub.s32 %s14, 2
        // Predicated region
        $region49: #{tpu_custom_call.1} parent=47 // pred_check
          %p380 = pneg %p153
        $region50: #{tpu_custom_call.1} parent=47 // pred_check_branch
          %382 = sbr.rel (%p380) target = $region52
        $region51: #{tpu_custom_call.1} parent=47 // pred_region
          %s383 = sand.u32 %s138, 1
          %s384 = scalar_lea.sflag [#allocation3], %s383
          %s385 = sand.u32 %s138, 1
          %s386 = smul.addr %s385, 8
          %s387 = scalar_lea.vmem [#allocation2], %s386
          %389 = dma.done %s384, 128
        $region52: #{tpu_custom_call.1} parent=47 // pred_fallthru
          _
      $region48: #{tpu_custom_call.1} parent=5 // pred_fallthru
        _
    $region6: #{tpu_custom_call.1} parent=1 // loop_footer
      %s18 = sadd.s32 1, %s14
    $region7: #{tpu_custom_call.1} parent=1 // loop_footer_branch
      %13 = sbr.rel target = $region3
    $region8: #{tpu_custom_call.1} parent=1 // loop_exit
      _
    %390 = vsyncpa [#allocation3], 1
    %s391 = scalar_lea.sflag [#allocation3], 1
    %392 = vsyncpa %s391, 1

</llo_original>
